<compile_context>
chip_gen: v5e
topology: v5e:2x2
jax: 0.10.0
libtpu: 0.0.40
codegen_flags: <defaults>
</compile_context>

<pallas_src>
import functools

import jax
import jax.numpy as jnp
from jax import lax
from jax.experimental import pallas as pl
from jax.experimental.pallas import tpu as pltpu


def _active_embed_kernel(x_ref, w_ref, b_ref, o_ref, *, embed_dim, pack, use_mxu):
    # x_ref: (TR, P)            packed input samples (P consecutive (b,l) samples/row)
    # w_ref: (P, P*E) if MXU    expansion+weight matrix M[p, q*E+e] = w[e]*(q==p)
    #        (1, P*E) otherwise conv1d k=1 weights tiled P times along lanes
    # b_ref: (1, P*E)           conv1d bias tiled P times along lanes
    # o_ref: (TR, P*E)          lane-dense output block (unmasked full-lane stores)
    tr, width = o_ref.shape
    x2 = x_ref[...].astype(jnp.float32)            # narrow slab; cast is cheap
    b = b_ref[...]

    if use_mxu:
        # Lane expansion + weight multiply on the MXU (vector-extended slot), leaving
        # the 4 VALU slots free for the sin polynomial. HIGHEST = multi-pass f32, so
        # accuracy matches the f32 PyTorch reference.
        z = jnp.dot(
            x2,
            w_ref[...],
            preferred_element_type=jnp.float32,
            precision=jax.lax.Precision.HIGHEST,
        )
    else:
        # pack <= 2: one lane broadcast plus at most one compare+select (pure VPU,
        # no integer divide, no XLU relayout).
        w = w_ref[...]
        x_exp = jnp.broadcast_to(x2[:, 0:1], (tr, width))
        if pack > 1:
            lane = lax.broadcasted_iota(jnp.int32, (tr, width), 1)
            for p in range(1, pack):
                x_exp = jnp.where(
                    lane >= p * embed_dim,
                    jnp.broadcast_to(x2[:, p:p + 1], (tr, width)),
                    x_exp,
                )
        z = x_exp * w

    o_ref[...] = jnp.sin(z + b).astype(o_ref.dtype)


def active_embed(x, weight, bias, *, out_dtype=None):
    """x: (B, 1, L); weight: (E, 1, 1); bias: (E,) -> (B, L, E) = sin(conv1d_k1(x)).transpose.

    out_dtype=jnp.bfloat16 halves HBM writeback (compute stays f32 in-kernel)."""
    B, C, L = x.shape
    assert C == 1, "ActiveEmbed expects a single input channel"
    E = weight.shape[0]
    out_dtype = jnp.dtype(out_dtype if out_dtype is not None else x.dtype)
    n_rows = B * L

    # Lane packing: P samples per 128-wide output row so stores are unmasked `vst`.
    if E <= 128 and 128 % E == 0:
        pack = 128 // E
    else:
        # TODO(synk): E that does not divide 128 keeps the natural (rows, E) layout
        # (full-dim block; masked stores only at the lane edge).
        pack = 1
    W = pack * E

    # Row-tile sublane alignment depends on the *output* dtype packing.
    row_align = {4: 8, 2: 16, 1: 32}.get(out_dtype.itemsize, 8)

    R_logical = pl.cdiv(n_rows, pack)

    # Grid-step selection: 1 step for tiny problems; otherwise an even number of
    # equal-size tiles (v7x: 2 TensorCores share the "parallel" axis), <=2048 rows
    # per tile (past the HBM-roofline knee; ~1 MiB f32 output tile -> VMEM is a
    # non-issue on every generation, no vmem_limit_bytes needed).
    if R_logical * W * out_dtype.itemsize <= 256 * 1024:
        n_steps = 1
    else:
        n_steps = pl.cdiv(R_logical, 2048)
        n_steps = n_steps + (n_steps % 2)            # round up to an even count

    block_rows = pl.cdiv(R_logical, n_steps * row_align) * row_align
    R = block_rows * n_steps                         # padded row count; all tiles full

    # Pad with zero samples -> padded rows compute sin(bias), are deterministic, and
    # are sliced off below (no partial tiles, no uninitialized VMEM reads).
    x_flat = x.reshape(n_rows)
    total = R * pack
    if total != n_rows:
        x_flat = jnp.concatenate([x_flat, jnp.zeros((total - n_rows,), x_flat.dtype)])
    x2 = x_flat.reshape(R, pack)                     # x2[r, p] = x.flat[r*pack + p]

    w_vec = weight.reshape(E).astype(jnp.float32)
    b_vec = bias.reshape(E).astype(jnp.float32)
    b_t = jnp.tile(b_vec, pack).reshape(1, W)

    use_mxu = pack >= 4
    if use_mxu:
        # M[p, q*E + e] = w[e] * (q == p): expansion + weight fold for the MXU.
        w_arg = (jnp.eye(pack, dtype=jnp.float32)[:, :, None]
                 * w_vec[None, None, :]).reshape(pack, W)
        w_spec = pl.BlockSpec((pack, W), lambda i: (0, 0))
    else:
        w_arg = jnp.tile(w_vec, pack).reshape(1, W)
        w_spec = pl.BlockSpec((1, W), lambda i: (0, 0))

    kernel = functools.partial(
        _active_embed_kernel, embed_dim=E, pack=pack, use_mxu=use_mxu)

    out2 = pl.pallas_call(
        kernel,
        out_shape=jax.ShapeDtypeStruct((R, W), out_dtype),
        grid_spec=pltpu.PrefetchScalarGridSpec(
            num_scalar_prefetch=0,
            grid=(n_steps,),
            in_specs=[
                pl.BlockSpec((block_rows, pack), lambda i: (i, 0)),   # packed x rows
                w_spec,                                               # shared weights
                pl.BlockSpec((1, W), lambda i: (0, 0)),               # shared bias
            ],
            out_specs=pl.BlockSpec((block_rows, W), lambda i: (i, 0)),
        ),
        compiler_params=pltpu.CompilerParams(
            dimension_semantics=("parallel",),
        ),
    )(x2, w_arg, b_t)

    # (R, pack*E) is exactly the row-major flattening of (B*L + pad, E).
    return out2.reshape(R * pack, E)[:n_rows].reshape(B, L, E)


def active_embed_ref(x, weight, bias):
    # Pure-JAX reference of the PyTorch forward (f32).
    E = weight.shape[0]
    w = weight.reshape(E).astype(jnp.float32)
    b = bias.astype(jnp.float32)
    y = x[:, 0, :, None].astype(jnp.float32) * w[None, None, :] + b[None, None, :]
    return jnp.sin(y)


if __name__ == "__main__":
    key = jax.random.PRNGKey(0)

    def run_case(B, L, E, out_dtype=None, tol=1e-5):
        k = jax.random.fold_in(key, E * 100000 + B * 1000 + L)
        k_x, k_w, k_b = jax.random.split(k, 3)
        weight = jax.random.normal(k_w, (E, 1, 1), dtype=jnp.float32) * 0.1
        bias = jax.random.normal(k_b, (E,), dtype=jnp.float32) * 0.1
        x = jax.random.normal(k_x, (B, 1, L), dtype=jnp.float32)

        out = jax.block_until_ready(active_embed(x, weight, bias, out_dtype=out_dtype))
        ref = active_embed_ref(x, weight, bias)

        assert out.shape == (B, L, E), (out.shape, (B, L, E))
        err = float(jnp.max(jnp.abs(out.astype(jnp.float32) - ref)))
        assert err <= tol, (B, L, E, err)

    # Module defaults (rec_len=25, embed_dim=64): pack=2 select path, 1 grid step,
    # padded rows exercise the no-fallback packed layout.
    run_case(2, 25, 64)
    # Small E -> pack=8: MXU expansion path (precision=HIGHEST keeps f32 accuracy).
    run_case(2, 25, 16)
    # Larger problem -> pack=4 MXU path, even 2-step "parallel" grid (v7x dual-TC).
    run_case(4, 1024, 32)
    # Optional bf16 writeback (v5e/v6e HBM-bound win); tolerance relaxed to bf16.
    run_case(2, 25, 64, out_dtype=jnp.bfloat16, tol=2e-2)

    print("KERNEL_OK")
</pallas_src>

<mosaic_0001>
module attributes {stable_mosaic.version = 11 : i64} {
  func.func @_active_embed_kernel(%arg0: i32, %arg1: memref<32x2xf32, #tpu.memory_space<vmem>>, %arg2: memref<1x128xf32, #tpu.memory_space<vmem>>, %arg3: memref<1x128xf32, #tpu.memory_space<vmem>>, %arg4: memref<32x128xf32, #tpu.memory_space<vmem>>) attributes {dimension_semantics = [#tpu.dimension_semantics<parallel>], iteration_bounds = array<i64: 1>, scalar_prefetch = 0 : i64, scratch_operands = 0 : i64, tpu.core_type = #tpu.core_type<tc>, window_params = [{transform_indices = @transform_0, window_bounds = array<i64: 32, 2>}, {pipeline_mode = #tpu.pipeline_mode<synchronous>, transform_indices = @transform_1, window_bounds = array<i64: 1, 128>}, {pipeline_mode = #tpu.pipeline_mode<synchronous>, transform_indices = @transform_2, window_bounds = array<i64: 1, 128>}, {transform_indices = @transform_3, window_bounds = array<i64: 32, 128>}]} {
    %c0 = arith.constant 0 : index
    %c0_0 = arith.constant 0 : index
    %0 = vector.load %arg1[%c0, %c0_0] : memref<32x2xf32, #tpu.memory_space<vmem>>, vector<32x2xf32>
    %c0_1 = arith.constant 0 : index
    %c0_2 = arith.constant 0 : index
    %1 = vector.load %arg3[%c0_1, %c0_2] : memref<1x128xf32, #tpu.memory_space<vmem>>, vector<1x128xf32>
    %c0_3 = arith.constant 0 : index
    %c0_4 = arith.constant 0 : index
    %2 = vector.load %arg2[%c0_3, %c0_4] : memref<1x128xf32, #tpu.memory_space<vmem>>, vector<1x128xf32>
    %3 = vector.extract_strided_slice %0 {offsets = [0, 0], sizes = [32, 1], strides = [1, 1]} : vector<32x2xf32> to vector<32x1xf32>
    %4 = vector.shape_cast %3 : vector<32x1xf32> to vector<32x1xf32>
    %5 = vector.broadcast %4 : vector<32x1xf32> to vector<32x128xf32>
    %6 = tpu.iota {dimensions = array<i32: 1>} : vector<32x128xi32>
    %c64_i32 = arith.constant 64 : i32
    %7 = vector.broadcast %c64_i32 : i32 to vector<32x128xi32>
    %8 = arith.cmpi sge, %6, %7 : vector<32x128xi32>
    %9 = vector.extract_strided_slice %0 {offsets = [0, 1], sizes = [32, 1], strides = [1, 1]} : vector<32x2xf32> to vector<32x1xf32>
    %10 = vector.shape_cast %9 : vector<32x1xf32> to vector<32x1xf32>
    %11 = vector.broadcast %10 : vector<32x1xf32> to vector<32x128xf32>
    %12 = arith.select %8, %11, %5 : vector<32x128xi1>, vector<32x128xf32>
    %13 = vector.broadcast %2 : vector<1x128xf32> to vector<32x128xf32>
    %14 = arith.mulf %12, %13 : vector<32x128xf32>
    %15 = vector.broadcast %1 : vector<1x128xf32> to vector<32x128xf32>
    %16 = arith.addf %14, %15 : vector<32x128xf32>
    %17 = math.sin %16 : vector<32x128xf32>
    %c0_5 = arith.constant 0 : index
    %c0_6 = arith.constant 0 : index
    %18 = vector.load %arg4[%c0_5, %c0_6] : memref<32x128xf32, #tpu.memory_space<vmem>>, vector<32x128xf32>
    tpu.vector_store %arg4[%c0_5, %c0_6], %17 {strides = array<i32>} : memref<32x128xf32, #tpu.memory_space<vmem>>, vector<32x128xf32>,
    return
  }
  func.func @transform_0(%arg0: i32) -> (i32, i32) {
    %c0_i32 = arith.constant 0 : i32
    %c0_i32_0 = arith.constant 0 : i32
    return %arg0, %c0_i32 : i32, i32
  }
  func.func @transform_1(%arg0: i32) -> (i32, i32) {
    %c0_i32 = arith.constant 0 : i32
    %c0_i32_0 = arith.constant 0 : i32
    %c0_i32_1 = arith.constant 0 : i32
    return %c0_i32, %c0_i32_0 : i32, i32
  }
  func.func @transform_2(%arg0: i32) -> (i32, i32) {
    %c0_i32 = arith.constant 0 : i32
    %c0_i32_0 = arith.constant 0 : i32
    %c0_i32_1 = arith.constant 0 : i32
    return %c0_i32, %c0_i32_0 : i32, i32
  }
  func.func @transform_3(%arg0: i32) -> (i32, i32) {
    %c0_i32 = arith.constant 0 : i32
    %c0_i32_0 = arith.constant 0 : i32
    return %arg0, %c0_i32 : i32, i32
  }
}

</mosaic_0001>

<llo_original>
// kernel: tpu_custom_call.1
$region0: #{tpu_custom_call.1}
  #allocation0 [shape = 'u32[]', space=smem, size = 0x4, offset = 0x4, fixed_abs, tag = 'smem constant byte address 0x4 - core index']
  #allocation1 [shape = 'u32[72,128]{1,0:T(1,128)}', space=vmem, size = 0x9000, scoped, tag = 'internal scratch']
  %s0 = inlined_call_operand.vmem [shape: f32[32,2], index: 0, kind: input, shape index: {}]
  %s1 = inlined_call_operand.vmem [shape: f32[1,128], index: 1, kind: input, shape index: {}]
  %s2 = inlined_call_operand.vmem [shape: f32[1,128], index: 2, kind: input, shape index: {}]
  %s3 = inlined_call_operand.hbm [shape: f32[32,128], index: 3, kind: output, shape index: {}]
  %s4 = sld [smem:[#allocation0]]
  $region22: #{tpu_custom_call.1} parent=0
    _
  %s6 = ssub.s32 1, %s4
  %s7 = scalar_select 0, %s6, %s4
  $region1: #{tpu_custom_call.1} parent=0
    #allocation2 [shape = 'u8[16384]{0}', space=vmem, size = 0x4000, scoped, tag = 'output window, operand 0, single buffered']
    #allocation3 [shape = 's32[1]{0}', space=sflag, size = 0x4, scoped, tag = 'scoped memory for tpu_custom_call.1']
    %8 = vsyncpa [#allocation3], 0
    // Predicated region
    $region2: #{tpu_custom_call.1} parent=1 // pred_check
      _
    $region3: #{tpu_custom_call.1} parent=1 // pred_check_branch
      %10 = sbr.rel (0) target = $region5
    $region4: #{tpu_custom_call.1} parent=1 // pred_region
      _
    $region5: #{tpu_custom_call.1} parent=1 // pred_fallthru
      _
    // Predicated region
    $region6: #{tpu_custom_call.1} parent=1 // pred_check
      _
    $region7: #{tpu_custom_call.1} parent=1 // pred_check_branch
      %12 = sbr.rel (0) target = $region9
    $region8: #{tpu_custom_call.1} parent=1 // pred_region
      _
    $region9: #{tpu_custom_call.1} parent=1 // pred_fallthru
      _
    // Predicated region
    $region10: #{tpu_custom_call.1} parent=1 // pred_check
      _
    $region11: #{tpu_custom_call.1} parent=1 // pred_check_branch
      %14 = sbr.rel (0) target = $region13
    $region12: #{tpu_custom_call.1} parent=1 // pred_region
      _
    $region13: #{tpu_custom_call.1} parent=1 // pred_fallthru
      _
    %v15 = vld [vmem:[%s0] sm:$0xff]
    %v16 = vld [vmem:[%s0 + $0x8] sm:$0xff]
    %v17 = vld [vmem:[%s0 + $0x10] sm:$0xff]
    %v18 = vld [vmem:[%s0 + $0x18] sm:$0xff]
    %v19 = vld [vmem:[%s2] sm:$0x1]
    %v20 = vld [vmem:[%s1] sm:$0x1]
    %22 = vset.pattern.permute.xlu0 0
    %23 = vperm.xlu0 %22, %v15
    %v24 = vpop.permute.xlu0 %23
    %27 = vset.pattern.permute.xlu0 0
    %28 = vperm.xlu0 %27, %v16
    %v29 = vpop.permute.xlu0 %28
    %32 = vset.pattern.permute.xlu0 0
    %33 = vperm.xlu0 %32, %v17
    %v34 = vpop.permute.xlu0 %33
    %37 = vset.pattern.permute.xlu0 0
    %38 = vperm.xlu0 %37, %v18
    %v39 = vpop.permute.xlu0 %38
    %v41 = vlaneseq
    %v42 = vand.u32 %v41, 127
    %vm43 = vcmp.ge.s32.totalorder %v42, 64
    %44 = vset.pattern.permute.xlu0 1
    %45 = vperm.xlu0 %44, %v15
    %v46 = vpop.permute.xlu0 %45
    %48 = vset.pattern.permute.xlu0 1
    %49 = vperm.xlu0 %48, %v16
    %v50 = vpop.permute.xlu0 %49
    %52 = vset.pattern.permute.xlu0 1
    %53 = vperm.xlu0 %52, %v17
    %v54 = vpop.permute.xlu0 %53
    %56 = vset.pattern.permute.xlu0 1
    %57 = vperm.xlu0 %56, %v18
    %v58 = vpop.permute.xlu0 %57
    %v60 = vsel %vm43, %v46, %v24
    %v61 = vsel %vm43, %v50, %v29
    %v62 = vsel %vm43, %v54, %v34
    %v63 = vsel %vm43, %v58, %v39
    %v65 = vperm.slane %v20, 0
    %v67 = vmul.f32 %v60, %v65
    %v68 = vmul.f32 %v61, %v65
    %v69 = vmul.f32 %v62, %v65
    %v70 = vmul.f32 %v63, %v65
    %v72 = vperm.slane %v19, 0
    %v74 = vadd.f32 %v67, %v72
    %v75 = vadd.f32 %v68, %v72
    %v76 = vadd.f32 %v69, %v72
    %v77 = vadd.f32 %v70, %v72
    %v78 = vand.u32 2147483647, %v74
    %vm79 = vcmp.le.f32.partialorder %v78, 0.7853982
    %vm80 = vcmp.lt.s32.totalorder %v74, 0
    %v81 = vand.u32 %v74, 2139095040
    %v82 = vshrl.u32 %v81, 23
    %v83 = vsub.s32 %v82, 127
    %v84 = vand.u32 2147483647, %v74
    %v85 = vand.u32 %v84, 8388607
    %v86 = vor.u32 %v85, 8388608
    %v87 = vsub.s32 0, %v86
    %v88 = vadd.s32 %v83, 1
    %vm89 = vcmp.gt.s32.totalorder %v88, 0
    %v90 = vsel %vm89, %v88, 0
    %v91 = vshrl.u32 %v90, 5
    %v92 = vand.u32 %v90, 31
    %v93 = vsub.s32 32, %v92
    %v94 = vshrl.u32 683565275, %v93
    %v95 = vshll.u32 683565275, %v92
    %v96 = vshrl.u32 2475754826, %v93
    %v97 = vor.u32 %v95, %v96
    %v98 = vshll.u32 2475754826, %v92
    %v99 = vshrl.u32 2131351028, %v93
    %v100 = vor.u32 %v98, %v99
    %v101 = vshll.u32 2131351028, %v92
    %v102 = vshrl.u32 2102212464, %v93
    %v103 = vor.u32 %v101, %v102
    %v104 = vshll.u32 2102212464, %v92
    %v105 = vshrl.u32 920167782, %v93
    %v106 = vor.u32 %v104, %v105
    %v107 = vshll.u32 920167782, %v92
    %v108 = vshrl.u32 1326507024, %v93
    %v109 = vor.u32 %v107, %v108
    %vm110 = vcmp.lt.s32.totalorder %v91, 1
    %vm111 = vcmp.lt.s32.totalorder %v91, 2
    %vm112 = vcmp.lt.s32.totalorder %v91, 3
    %vm113 = vcmp.lt.s32.totalorder %v91, 4
    %v114 = vsel %vm110, %v94, %v97
    %v115 = vsel %vm113, %v103, 2102212464
    %v116 = vsel %vm112, %v100, %v115
    %v117 = vsel %vm111, %v114, %v116
    %v118 = vsel %vm110, %v97, %v100
    %v119 = vsel %vm113, %v106, 920167782
    %v120 = vsel %vm112, %v103, %v119
    %v121 = vsel %vm111, %v118, %v120
    %v122 = vsel %vm110, %v100, %v103
    %v123 = vsel %vm113, %v109, 1326507024
    %v124 = vsel %vm112, %v106, %v123
    %v125 = vsel %vm111, %v122, %v124
    %v126 = vshll.u32 %v86, 8
    %v127 = vand.u32 %v126, 65535
    %v128 = vshrl.u32 %v126, 16
    %v129 = vand.u32 %v125, 65535
    %v130 = vshrl.u32 %v125, 16
    %v131 = vmul.u32 %v127, %v129
    %v132 = vmul.u32 %v127, %v130
    %v133 = vmul.u32 %v128, %v129
    %v134 = vmul.u32 %v128, %v130
    %v135 = vshll.u32 %v132, 16
    %v136 = vshrl.u32 %v132, 16
    %v137 = vshll.u32 %v133, 16
    %v138 = vshrl.u32 %v133, 16
    %vm139 = vc.u32 %v131, %v135
    %v140 = vsel %vm139, 1, 0
    %v141 = vadd.s32 %v131, %v135
    %v142 = vadd.s32 %v134, %v140
    %vm143 = vc.u32 %v141, %v137
    %v144 = vsel %vm143, 1, 0
    %v145 = vadd.s32 %v141, %v137
    %v146 = vadd.s32 %v142, %v144
    %v147 = vadd.s32 %v146, %v136
    %v148 = vadd.s32 %v147, %v138
    %v149 = vand.u32 %v126, 65535
    %v150 = vshrl.u32 %v126, 16
    %v151 = vand.u32 %v121, 65535
    %v152 = vshrl.u32 %v121, 16
    %v153 = vmul.u32 %v149, %v151
    %v154 = vmul.u32 %v149, %v152
    %v155 = vmul.u32 %v150, %v151
    %v156 = vmul.u32 %v150, %v152
    %v157 = vshll.u32 %v154, 16
    %v158 = vshrl.u32 %v154, 16
    %v159 = vshll.u32 %v155, 16
    %v160 = vshrl.u32 %v155, 16
    %vm161 = vc.u32 %v153, %v157
    %v162 = vsel %vm161, 1, 0
    %v163 = vadd.s32 %v153, %v157
    %v164 = vadd.s32 %v156, %v162
    %vm165 = vc.u32 %v163, %v159
    %v166 = vsel %vm165, 1, 0
    %v167 = vadd.s32 %v163, %v159
    %v168 = vadd.s32 %v164, %v166
    %v169 = vadd.s32 %v168, %v158
    %v170 = vadd.s32 %v169, %v160
    %v171 = vmul.u32 %v126, %v117
    %v172 = vadd.s32 %v148, %v167
    %vm173 = vc.u32 %v148, %v167
    %v174 = vadd.s32 %v170, 1
    %v175 = vsel %vm173, %v174, %v170
    %v176 = vadd.s32 %v171, %v175
    %v177 = vadd.s32 %v176, 536870912
    %v178 = vshrl.u32 %v177, 30
    %v179 = vshll.u32 %v178, 30
    %v180 = vsub.s32 %v176, %v179
    %vm181 = vcmp.lt.s32.totalorder %v180, 0
    %v182 = vsub.s32 0, %v180
    %v183 = vsel %vm181, %v182, %v180
    %v184 = vclz %v183
    %v185 = vsub.s32 %v184, 2
    %vm186 = vcmp.gt.s32.totalorder 0, %v185
    %v187 = vsel %vm186, 0, %v185
    %v188 = vsub.s32 32, %v187
    %v189 = vshll.u32 %v180, %v187
    %v190 = vshrl.u32 %v172, %v188
    %v191 = vor.u32 %v189, %v190
    %v192 = vsub.s32 4294967266, %v187
    %v193 = vadd.s32 %v192, 127
    %v194 = vshll.u32 %v193, 23
    %v195 = vor.u32 4788187, %v194
    %v196 = vand.u32 2147483647, %v195
    %v198 = vcvt.s32.f32 %v191
    %v199 = vmul.f32 %v198, %v196
    %v200 = vxor.u32 %v199, 2147483648
    %v201 = vsel %vm80, %v200, %v199
    %v202 = vsub.s32 4, %v178
    %v203 = vsel %vm80, %v202, %v178
    %v204 = vsel %vm79, %v74, %v201
    %v205 = vsel %vm79, 0, %v203
    %v206 = vmul.f32 %v204, %v204
    %v207 = vmul.f32 %v206, -0.001358992
    %v208 = vadd.f32 %v207, 0.041655596
    %v209 = vmul.f32 %v206, %v208
    %v210 = vadd.f32 %v209, -0.4999988
    %v211 = vmul.f32 %v206, %v210
    %v212 = vadd.f32 1.0, %v211
    %v213 = vmul.f32 %v204, %v204
    %v214 = vmul.f32 %v213, -0.00019511016
    %v215 = vadd.f32 %v214, 0.008332121
    %v216 = vmul.f32 %v213, %v215
    %v217 = vadd.f32 %v216, -0.16666654
    %v218 = vmul.f32 %v213, %v217
    %v219 = vadd.f32 %v218, 1.0
    %v220 = vmul.f32 %v219, %v204
    %vm221 = vweird.f32 %v74
    %v222 = vadd.s32 %v205, 3
    %v223 = vand.u32 %v222, 3
    %vm224 = vcmp.lt.s32.totalorder %v223, 2
    %vm225 = vcmp.eq.s32.totalorder %v223, 0
    %v226 = vxor.u32 %v220, 2147483648
    %v227 = vsel %vm225, %v212, %v226
    %vm228 = vcmp.eq.s32.totalorder %v223, 2
    %v229 = vxor.u32 %v212, 2147483648
    %v230 = vsel %vm228, %v229, %v220
    %v231 = vsel %vm224, %v227, %v230
    %v232 = vsel %vm221, nan, %v231
    %v233 = vand.u32 2147483647, %v75
    %vm234 = vcmp.le.f32.partialorder %v233, 0.7853982
    %vm235 = vcmp.lt.s32.totalorder %v75, 0
    %v236 = vand.u32 %v75, 2139095040
    %v237 = vshrl.u32 %v236, 23
    %v238 = vsub.s32 %v237, 127
    %v239 = vand.u32 2147483647, %v75
    %v240 = vand.u32 %v239, 8388607
    %v241 = vor.u32 %v240, 8388608
    %v242 = vsub.s32 0, %v241
    %v243 = vadd.s32 %v238, 1
    %vm244 = vcmp.gt.s32.totalorder %v243, 0
    %v245 = vsel %vm244, %v243, 0
    %v246 = vshrl.u32 %v245, 5
    %v247 = vand.u32 %v245, 31
    %v248 = vsub.s32 32, %v247
    %v249 = vshrl.u32 683565275, %v248
    %v250 = vshll.u32 683565275, %v247
    %v251 = vshrl.u32 2475754826, %v248
    %v252 = vor.u32 %v250, %v251
    %v253 = vshll.u32 2475754826, %v247
    %v254 = vshrl.u32 2131351028, %v248
    %v255 = vor.u32 %v253, %v254
    %v256 = vshll.u32 2131351028, %v247
    %v257 = vshrl.u32 2102212464, %v248
    %v258 = vor.u32 %v256, %v257
    %v259 = vshll.u32 2102212464, %v247
    %v260 = vshrl.u32 920167782, %v248
    %v261 = vor.u32 %v259, %v260
    %v262 = vshll.u32 920167782, %v247
    %v263 = vshrl.u32 1326507024, %v248
    %v264 = vor.u32 %v262, %v263
    %vm265 = vcmp.lt.s32.totalorder %v246, 1
    %vm266 = vcmp.lt.s32.totalorder %v246, 2
    %vm267 = vcmp.lt.s32.totalorder %v246, 3
    %vm268 = vcmp.lt.s32.totalorder %v246, 4
    %v269 = vsel %vm265, %v249, %v252
    %v270 = vsel %vm268, %v258, 2102212464
    %v271 = vsel %vm267, %v255, %v270
    %v272 = vsel %vm266, %v269, %v271
    %v273 = vsel %vm265, %v252, %v255
    %v274 = vsel %vm268, %v261, 920167782
    %v275 = vsel %vm267, %v258, %v274
    %v276 = vsel %vm266, %v273, %v275
    %v277 = vsel %vm265, %v255, %v258
    %v278 = vsel %vm268, %v264, 1326507024
    %v279 = vsel %vm267, %v261, %v278
    %v280 = vsel %vm266, %v277, %v279
    %v281 = vshll.u32 %v241, 8
    %v282 = vand.u32 %v281, 65535
    %v283 = vshrl.u32 %v281, 16
    %v284 = vand.u32 %v280, 65535
    %v285 = vshrl.u32 %v280, 16
    %v286 = vmul.u32 %v282, %v284
    %v287 = vmul.u32 %v282, %v285
    %v288 = vmul.u32 %v283, %v284
    %v289 = vmul.u32 %v283, %v285
    %v290 = vshll.u32 %v287, 16
    %v291 = vshrl.u32 %v287, 16
    %v292 = vshll.u32 %v288, 16
    %v293 = vshrl.u32 %v288, 16
    %vm294 = vc.u32 %v286, %v290
    %v295 = vsel %vm294, 1, 0
    %v296 = vadd.s32 %v286, %v290
    %v297 = vadd.s32 %v289, %v295
    %vm298 = vc.u32 %v296, %v292
    %v299 = vsel %vm298, 1, 0
    %v300 = vadd.s32 %v296, %v292
    %v301 = vadd.s32 %v297, %v299
    %v302 = vadd.s32 %v301, %v291
    %v303 = vadd.s32 %v302, %v293
    %v304 = vand.u32 %v281, 65535
    %v305 = vshrl.u32 %v281, 16
    %v306 = vand.u32 %v276, 65535
    %v307 = vshrl.u32 %v276, 16
    %v308 = vmul.u32 %v304, %v306
    %v309 = vmul.u32 %v304, %v307
    %v310 = vmul.u32 %v305, %v306
    %v311 = vmul.u32 %v305, %v307
    %v312 = vshll.u32 %v309, 16
    %v313 = vshrl.u32 %v309, 16
    %v314 = vshll.u32 %v310, 16
    %v315 = vshrl.u32 %v310, 16
    %vm316 = vc.u32 %v308, %v312
    %v317 = vsel %vm316, 1, 0
    %v318 = vadd.s32 %v308, %v312
    %v319 = vadd.s32 %v311, %v317
    %vm320 = vc.u32 %v318, %v314
    %v321 = vsel %vm320, 1, 0
    %v322 = vadd.s32 %v318, %v314
    %v323 = vadd.s32 %v319, %v321
    %v324 = vadd.s32 %v323, %v313
    %v325 = vadd.s32 %v324, %v315
    %v326 = vmul.u32 %v281, %v272
    %v327 = vadd.s32 %v303, %v322
    %vm328 = vc.u32 %v303, %v322
    %v329 = vadd.s32 %v325, 1
    %v330 = vsel %vm328, %v329, %v325
    %v331 = vadd.s32 %v326, %v330
    %v332 = vadd.s32 %v331, 536870912
    %v333 = vshrl.u32 %v332, 30
    %v334 = vshll.u32 %v333, 30
    %v335 = vsub.s32 %v331, %v334
    %vm336 = vcmp.lt.s32.totalorder %v335, 0
    %v337 = vsub.s32 0, %v335
    %v338 = vsel %vm336, %v337, %v335
    %v339 = vclz %v338
    %v340 = vsub.s32 %v339, 2
    %vm341 = vcmp.gt.s32.totalorder 0, %v340
    %v342 = vsel %vm341, 0, %v340
    %v343 = vsub.s32 32, %v342
    %v344 = vshll.u32 %v335, %v342
    %v345 = vshrl.u32 %v327, %v343
    %v346 = vor.u32 %v344, %v345
    %v347 = vsub.s32 4294967266, %v342
    %v348 = vadd.s32 %v347, 127
    %v349 = vshll.u32 %v348, 23
    %v350 = vor.u32 4788187, %v349
    %v351 = vand.u32 2147483647, %v350
    %v353 = vcvt.s32.f32 %v346
    %v354 = vmul.f32 %v353, %v351
    %v355 = vxor.u32 %v354, 2147483648
    %v356 = vsel %vm235, %v355, %v354
    %v357 = vsub.s32 4, %v333
    %v358 = vsel %vm235, %v357, %v333
    %v359 = vsel %vm234, %v75, %v356
    %v360 = vsel %vm234, 0, %v358
    %v361 = vmul.f32 %v359, %v359
    %v362 = vmul.f32 %v361, -0.001358992
    %v363 = vadd.f32 %v362, 0.041655596
    %v364 = vmul.f32 %v361, %v363
    %v365 = vadd.f32 %v364, -0.4999988
    %v366 = vmul.f32 %v361, %v365
    %v367 = vadd.f32 1.0, %v366
    %v368 = vmul.f32 %v359, %v359
    %v369 = vmul.f32 %v368, -0.00019511016
    %v370 = vadd.f32 %v369, 0.008332121
    %v371 = vmul.f32 %v368, %v370
    %v372 = vadd.f32 %v371, -0.16666654
    %v373 = vmul.f32 %v368, %v372
    %v374 = vadd.f32 %v373, 1.0
    %v375 = vmul.f32 %v374, %v359
    %vm376 = vweird.f32 %v75
    %v377 = vadd.s32 %v360, 3
    %v378 = vand.u32 %v377, 3
    %vm379 = vcmp.lt.s32.totalorder %v378, 2
    %vm380 = vcmp.eq.s32.totalorder %v378, 0
    %v381 = vxor.u32 %v375, 2147483648
    %v382 = vsel %vm380, %v367, %v381
    %vm383 = vcmp.eq.s32.totalorder %v378, 2
    %v384 = vxor.u32 %v367, 2147483648
    %v385 = vsel %vm383, %v384, %v375
    %v386 = vsel %vm379, %v382, %v385
    %v387 = vsel %vm376, nan, %v386
    %v388 = vand.u32 2147483647, %v76
    %vm389 = vcmp.le.f32.partialorder %v388, 0.7853982
    %vm390 = vcmp.lt.s32.totalorder %v76, 0
    %v391 = vand.u32 %v76, 2139095040
    %v392 = vshrl.u32 %v391, 23
    %v393 = vsub.s32 %v392, 127
    %v394 = vand.u32 2147483647, %v76
    %v395 = vand.u32 %v394, 8388607
    %v396 = vor.u32 %v395, 8388608
    %v397 = vsub.s32 0, %v396
    %v398 = vadd.s32 %v393, 1
    %vm399 = vcmp.gt.s32.totalorder %v398, 0
    %v400 = vsel %vm399, %v398, 0
    %v401 = vshrl.u32 %v400, 5
    %v402 = vand.u32 %v400, 31
    %v403 = vsub.s32 32, %v402
    %v404 = vshrl.u32 683565275, %v403
    %v405 = vshll.u32 683565275, %v402
    %v406 = vshrl.u32 2475754826, %v403
    %v407 = vor.u32 %v405, %v406
    %v408 = vshll.u32 2475754826, %v402
    %v409 = vshrl.u32 2131351028, %v403
    %v410 = vor.u32 %v408, %v409
    %v411 = vshll.u32 2131351028, %v402
    %v412 = vshrl.u32 2102212464, %v403
    %v413 = vor.u32 %v411, %v412
    %v414 = vshll.u32 2102212464, %v402
    %v415 = vshrl.u32 920167782, %v403
    %v416 = vor.u32 %v414, %v415
    %v417 = vshll.u32 920167782, %v402
    %v418 = vshrl.u32 1326507024, %v403
    %v419 = vor.u32 %v417, %v418
    %vm420 = vcmp.lt.s32.totalorder %v401, 1
    %vm421 = vcmp.lt.s32.totalorder %v401, 2
    %vm422 = vcmp.lt.s32.totalorder %v401, 3
    %vm423 = vcmp.lt.s32.totalorder %v401, 4
    %v424 = vsel %vm420, %v404, %v407
    %v425 = vsel %vm423, %v413, 2102212464
    %v426 = vsel %vm422, %v410, %v425
    %v427 = vsel %vm421, %v424, %v426
    %v428 = vsel %vm420, %v407, %v410
    %v429 = vsel %vm423, %v416, 920167782
    %v430 = vsel %vm422, %v413, %v429
    %v431 = vsel %vm421, %v428, %v430
    %v432 = vsel %vm420, %v410, %v413
    %v433 = vsel %vm423, %v419, 1326507024
    %v434 = vsel %vm422, %v416, %v433
    %v435 = vsel %vm421, %v432, %v434
    %v436 = vshll.u32 %v396, 8
    %v437 = vand.u32 %v436, 65535
    %v438 = vshrl.u32 %v436, 16
    %v439 = vand.u32 %v435, 65535
    %v440 = vshrl.u32 %v435, 16
    %v441 = vmul.u32 %v437, %v439
    %v442 = vmul.u32 %v437, %v440
    %v443 = vmul.u32 %v438, %v439
    %v444 = vmul.u32 %v438, %v440
    %v445 = vshll.u32 %v442, 16
    %v446 = vshrl.u32 %v442, 16
    %v447 = vshll.u32 %v443, 16
    %v448 = vshrl.u32 %v443, 16
    %vm449 = vc.u32 %v441, %v445
    %v450 = vsel %vm449, 1, 0
    %v451 = vadd.s32 %v441, %v445
    %v452 = vadd.s32 %v444, %v450
    %vm453 = vc.u32 %v451, %v447
    %v454 = vsel %vm453, 1, 0
    %v455 = vadd.s32 %v451, %v447
    %v456 = vadd.s32 %v452, %v454
    %v457 = vadd.s32 %v456, %v446
    %v458 = vadd.s32 %v457, %v448
    %v459 = vand.u32 %v436, 65535
    %v460 = vshrl.u32 %v436, 16
    %v461 = vand.u32 %v431, 65535
    %v462 = vshrl.u32 %v431, 16
    %v463 = vmul.u32 %v459, %v461
    %v464 = vmul.u32 %v459, %v462
    %v465 = vmul.u32 %v460, %v461
    %v466 = vmul.u32 %v460, %v462
    %v467 = vshll.u32 %v464, 16
    %v468 = vshrl.u32 %v464, 16
    %v469 = vshll.u32 %v465, 16
    %v470 = vshrl.u32 %v465, 16
    %vm471 = vc.u32 %v463, %v467
    %v472 = vsel %vm471, 1, 0
    %v473 = vadd.s32 %v463, %v467
    %v474 = vadd.s32 %v466, %v472
    %vm475 = vc.u32 %v473, %v469
    %v476 = vsel %vm475, 1, 0
    %v477 = vadd.s32 %v473, %v469
    %v478 = vadd.s32 %v474, %v476
    %v479 = vadd.s32 %v478, %v468
    %v480 = vadd.s32 %v479, %v470
    %v481 = vmul.u32 %v436, %v427
    %v482 = vadd.s32 %v458, %v477
    %vm483 = vc.u32 %v458, %v477
    %v484 = vadd.s32 %v480, 1
    %v485 = vsel %vm483, %v484, %v480
    %v486 = vadd.s32 %v481, %v485
    %v487 = vadd.s32 %v486, 536870912
    %v488 = vshrl.u32 %v487, 30
    %v489 = vshll.u32 %v488, 30
    %v490 = vsub.s32 %v486, %v489
    %vm491 = vcmp.lt.s32.totalorder %v490, 0
    %v492 = vsub.s32 0, %v490
    %v493 = vsel %vm491, %v492, %v490
    %v494 = vclz %v493
    %v495 = vsub.s32 %v494, 2
    %vm496 = vcmp.gt.s32.totalorder 0, %v495
    %v497 = vsel %vm496, 0, %v495
    %v498 = vsub.s32 32, %v497
    %v499 = vshll.u32 %v490, %v497
    %v500 = vshrl.u32 %v482, %v498
    %v501 = vor.u32 %v499, %v500
    %v502 = vsub.s32 4294967266, %v497
    %v503 = vadd.s32 %v502, 127
    %v504 = vshll.u32 %v503, 23
    %v505 = vor.u32 4788187, %v504
    %v506 = vand.u32 2147483647, %v505
    %v508 = vcvt.s32.f32 %v501
    %v509 = vmul.f32 %v508, %v506
    %v510 = vxor.u32 %v509, 2147483648
    %v511 = vsel %vm390, %v510, %v509
    %v512 = vsub.s32 4, %v488
    %v513 = vsel %vm390, %v512, %v488
    %v514 = vsel %vm389, %v76, %v511
    %v515 = vsel %vm389, 0, %v513
    %v516 = vmul.f32 %v514, %v514
    %v517 = vmul.f32 %v516, -0.001358992
    %v518 = vadd.f32 %v517, 0.041655596
    %v519 = vmul.f32 %v516, %v518
    %v520 = vadd.f32 %v519, -0.4999988
    %v521 = vmul.f32 %v516, %v520
    %v522 = vadd.f32 1.0, %v521
    %v523 = vmul.f32 %v514, %v514
    %v524 = vmul.f32 %v523, -0.00019511016
    %v525 = vadd.f32 %v524, 0.008332121
    %v526 = vmul.f32 %v523, %v525
    %v527 = vadd.f32 %v526, -0.16666654
    %v528 = vmul.f32 %v523, %v527
    %v529 = vadd.f32 %v528, 1.0
    %v530 = vmul.f32 %v529, %v514
    %vm531 = vweird.f32 %v76
    %v532 = vadd.s32 %v515, 3
    %v533 = vand.u32 %v532, 3
    %vm534 = vcmp.lt.s32.totalorder %v533, 2
    %vm535 = vcmp.eq.s32.totalorder %v533, 0
    %v536 = vxor.u32 %v530, 2147483648
    %v537 = vsel %vm535, %v522, %v536
    %vm538 = vcmp.eq.s32.totalorder %v533, 2
    %v539 = vxor.u32 %v522, 2147483648
    %v540 = vsel %vm538, %v539, %v530
    %v541 = vsel %vm534, %v537, %v540
    %v542 = vsel %vm531, nan, %v541
    %v543 = vand.u32 2147483647, %v77
    %vm544 = vcmp.le.f32.partialorder %v543, 0.7853982
    %vm545 = vcmp.lt.s32.totalorder %v77, 0
    %v546 = vand.u32 %v77, 2139095040
    %v547 = vshrl.u32 %v546, 23
    %v548 = vsub.s32 %v547, 127
    %v549 = vand.u32 2147483647, %v77
    %v550 = vand.u32 %v549, 8388607
    %v551 = vor.u32 %v550, 8388608
    %v552 = vsub.s32 0, %v551
    %v553 = vadd.s32 %v548, 1
    %vm554 = vcmp.gt.s32.totalorder %v553, 0
    %v555 = vsel %vm554, %v553, 0
    %v556 = vshrl.u32 %v555, 5
    %v557 = vand.u32 %v555, 31
    %v558 = vsub.s32 32, %v557
    %v559 = vshrl.u32 683565275, %v558
    %v560 = vshll.u32 683565275, %v557
    %v561 = vshrl.u32 2475754826, %v558
    %v562 = vor.u32 %v560, %v561
    %v563 = vshll.u32 2475754826, %v557
    %v564 = vshrl.u32 2131351028, %v558
    %v565 = vor.u32 %v563, %v564
    %v566 = vshll.u32 2131351028, %v557
    %v567 = vshrl.u32 2102212464, %v558
    %v568 = vor.u32 %v566, %v567
    %v569 = vshll.u32 2102212464, %v557
    %v570 = vshrl.u32 920167782, %v558
    %v571 = vor.u32 %v569, %v570
    %v572 = vshll.u32 920167782, %v557
    %v573 = vshrl.u32 1326507024, %v558
    %v574 = vor.u32 %v572, %v573
    %vm575 = vcmp.lt.s32.totalorder %v556, 1
    %vm576 = vcmp.lt.s32.totalorder %v556, 2
    %vm577 = vcmp.lt.s32.totalorder %v556, 3
    %vm578 = vcmp.lt.s32.totalorder %v556, 4
    %v579 = vsel %vm575, %v559, %v562
    %v580 = vsel %vm578, %v568, 2102212464
    %v581 = vsel %vm577, %v565, %v580
    %v582 = vsel %vm576, %v579, %v581
    %v583 = vsel %vm575, %v562, %v565
    %v584 = vsel %vm578, %v571, 920167782
    %v585 = vsel %vm577, %v568, %v584
    %v586 = vsel %vm576, %v583, %v585
    %v587 = vsel %vm575, %v565, %v568
    %v588 = vsel %vm578, %v574, 1326507024
    %v589 = vsel %vm577, %v571, %v588
    %v590 = vsel %vm576, %v587, %v589
    %v591 = vshll.u32 %v551, 8
    %v592 = vand.u32 %v591, 65535
    %v593 = vshrl.u32 %v591, 16
    %v594 = vand.u32 %v590, 65535
    %v595 = vshrl.u32 %v590, 16
    %v596 = vmul.u32 %v592, %v594
    %v597 = vmul.u32 %v592, %v595
    %v598 = vmul.u32 %v593, %v594
    %v599 = vmul.u32 %v593, %v595
    %v600 = vshll.u32 %v597, 16
    %v601 = vshrl.u32 %v597, 16
    %v602 = vshll.u32 %v598, 16
    %v603 = vshrl.u32 %v598, 16
    %vm604 = vc.u32 %v596, %v600
    %v605 = vsel %vm604, 1, 0
    %v606 = vadd.s32 %v596, %v600
    %v607 = vadd.s32 %v599, %v605
    %vm608 = vc.u32 %v606, %v602
    %v609 = vsel %vm608, 1, 0
    %v610 = vadd.s32 %v606, %v602
    %v611 = vadd.s32 %v607, %v609
    %v612 = vadd.s32 %v611, %v601
    %v613 = vadd.s32 %v612, %v603
    %v614 = vand.u32 %v591, 65535
    %v615 = vshrl.u32 %v591, 16
    %v616 = vand.u32 %v586, 65535
    %v617 = vshrl.u32 %v586, 16
    %v618 = vmul.u32 %v614, %v616
    %v619 = vmul.u32 %v614, %v617
    %v620 = vmul.u32 %v615, %v616
    %v621 = vmul.u32 %v615, %v617
    %v622 = vshll.u32 %v619, 16
    %v623 = vshrl.u32 %v619, 16
    %v624 = vshll.u32 %v620, 16
    %v625 = vshrl.u32 %v620, 16
    %vm626 = vc.u32 %v618, %v622
    %v627 = vsel %vm626, 1, 0
    %v628 = vadd.s32 %v618, %v622
    %v629 = vadd.s32 %v621, %v627
    %vm630 = vc.u32 %v628, %v624
    %v631 = vsel %vm630, 1, 0
    %v632 = vadd.s32 %v628, %v624
    %v633 = vadd.s32 %v629, %v631
    %v634 = vadd.s32 %v633, %v623
    %v635 = vadd.s32 %v634, %v625
    %v636 = vmul.u32 %v591, %v582
    %v637 = vadd.s32 %v613, %v632
    %vm638 = vc.u32 %v613, %v632
    %v639 = vadd.s32 %v635, 1
    %v640 = vsel %vm638, %v639, %v635
    %v641 = vadd.s32 %v636, %v640
    %v642 = vadd.s32 %v641, 536870912
    %v643 = vshrl.u32 %v642, 30
    %v644 = vshll.u32 %v643, 30
    %v645 = vsub.s32 %v641, %v644
    %vm646 = vcmp.lt.s32.totalorder %v645, 0
    %v647 = vsub.s32 0, %v645
    %v648 = vsel %vm646, %v647, %v645
    %v649 = vclz %v648
    %v650 = vsub.s32 %v649, 2
    %vm651 = vcmp.gt.s32.totalorder 0, %v650
    %v652 = vsel %vm651, 0, %v650
    %v653 = vsub.s32 32, %v652
    %v654 = vshll.u32 %v645, %v652
    %v655 = vshrl.u32 %v637, %v653
    %v656 = vor.u32 %v654, %v655
    %v657 = vsub.s32 4294967266, %v652
    %v658 = vadd.s32 %v657, 127
    %v659 = vshll.u32 %v658, 23
    %v660 = vor.u32 4788187, %v659
    %v661 = vand.u32 2147483647, %v660
    %v663 = vcvt.s32.f32 %v656
    %v664 = vmul.f32 %v663, %v661
    %v665 = vxor.u32 %v664, 2147483648
    %v666 = vsel %vm545, %v665, %v664
    %v667 = vsub.s32 4, %v643
    %v668 = vsel %vm545, %v667, %v643
    %v669 = vsel %vm544, %v77, %v666
    %v670 = vsel %vm544, 0, %v668
    %v671 = vmul.f32 %v669, %v669
    %v672 = vmul.f32 %v671, -0.001358992
    %v673 = vadd.f32 %v672, 0.041655596
    %v674 = vmul.f32 %v671, %v673
    %v675 = vadd.f32 %v674, -0.4999988
    %v676 = vmul.f32 %v671, %v675
    %v677 = vadd.f32 1.0, %v676
    %v678 = vmul.f32 %v669, %v669
    %v679 = vmul.f32 %v678, -0.00019511016
    %v680 = vadd.f32 %v679, 0.008332121
    %v681 = vmul.f32 %v678, %v680
    %v682 = vadd.f32 %v681, -0.16666654
    %v683 = vmul.f32 %v678, %v682
    %v684 = vadd.f32 %v683, 1.0
    %v685 = vmul.f32 %v684, %v669
    %vm686 = vweird.f32 %v77
    %v687 = vadd.s32 %v670, 3
    %v688 = vand.u32 %v687, 3
    %vm689 = vcmp.lt.s32.totalorder %v688, 2
    %vm690 = vcmp.eq.s32.totalorder %v688, 0
    %v691 = vxor.u32 %v685, 2147483648
    %v692 = vsel %vm690, %v677, %v691
    %vm693 = vcmp.eq.s32.totalorder %v688, 2
    %v694 = vxor.u32 %v677, 2147483648
    %v695 = vsel %vm693, %v694, %v685
    %v696 = vsel %vm689, %v692, %v695
    %v697 = vsel %vm686, nan, %v696
    %698 = vst [vmem:[#allocation2] sm:$0xff] %v232
    %699 = vst [vmem:[#allocation2 + $0x8] sm:$0xff] %v387
    %700 = vst [vmem:[#allocation2 + $0x10] sm:$0xff] %v542
    %701 = vst [vmem:[#allocation2 + $0x18] sm:$0xff] %v697
    // Predicated region
    $region14: #{tpu_custom_call.1} parent=1 // pred_check
      _
    $region15: #{tpu_custom_call.1} parent=1 // pred_check_branch
      %703 = sbr.rel (0) target = $region17
    $region16: #{tpu_custom_call.1} parent=1 // pred_region
      %705 = vsyncadd [#allocation3], 0
      %s706 = sshll.u32 [#allocation2], 4
      %s707 = int_to_ptr.vmem [resolvable:$true] %s706
      %s708 = sshll.u32 %s3, 4
      %s709 = int_to_ptr.hbm [resolvable:$true] %s708
      %714 = dma.vmem_to_hbm [thread:$0]  %s707, 512, %s709, [#allocation3], 128, 128, 8
    $region17: #{tpu_custom_call.1} parent=1 // pred_fallthru
      _
    // Predicated region
    $region18: #{tpu_custom_call.1} parent=1 // pred_check
      _
    $region19: #{tpu_custom_call.1} parent=1 // pred_check_branch
      %716 = sbr.rel (0) target = $region21
    $region20: #{tpu_custom_call.1} parent=1 // pred_region
      %718 = dma.done [#allocation3], 512
    $region21: #{tpu_custom_call.1} parent=1 // pred_fallthru
      _
    %719 = vsyncpa [#allocation3], 1

</llo_original>
